<compile_context>
chip_gen: v5e
topology: v5e:2x2
jax: 0.10.0
libtpu: 0.0.40
codegen_flags: <defaults>
</compile_context>

<pallas_src>
import functools

import jax
import jax.numpy as jnp
from jax import lax
from jax.experimental import pallas as pl
from jax.experimental.pallas import tpu as pltpu


# ----------------------------------------------------------------------------
# Pallas kernel 1: fused im2col conv = single matmul + bias + ReLU.
#   w_ref : (Cout, K)   reshaped/transposed 3x3 conv weights (bf16)
#   p_ref : (K,   M)    im2col patches, transposed (bf16), M = N*H*W
#   b_ref : (Cout, 1)   bias (f32)
#   o_ref : (Cout, M)   output (f32) -- lane axis M is a multiple of 128,
#                       so stores are unmasked and lane-dense.
# ----------------------------------------------------------------------------
def matmul_bias_relu_kernel(w_ref, p_ref, b_ref, o_ref):
    acc = jnp.dot(w_ref[...], p_ref[...], preferred_element_type=jnp.float32)
    o_ref[...] = jnp.maximum(acc + b_ref[...], 0.0)


@functools.partial(jax.jit, static_argnames=("kh", "kw"))
def _conv3x3_relu_fused_impl(x_nhwc, w_T_bf16, b_col, *, kh, kw):
    """3x3 'same' conv + bias + ReLU for a bank of convs fused along Cout.

    x_nhwc: (N, H, W, Cin) f32; w_T_bf16: (Cout, K) bf16 with K = kh*kw*Cin;
    b_col: (Cout, 1) f32.  Returns (N, H, W, Cout) f32.
    """
    N, H, W, Cin = x_nhwc.shape
    Cout = w_T_bf16.shape[0]
    M = N * H * W
    K = kh * kw * Cin

    # Wrapper-side im2col (XLA glue, fused under this jit): zero 'same'
    # padding, then the 9 shifted taps stacked as rows of the transposed
    # patch matrix so M (=512) becomes the kernel's lane axis and K sits on
    # sublanes (Cin=4 never lands on the lane axis inside the kernel).
    x_pad = jnp.pad(x_nhwc, ((0, 0), (1, 1), (1, 1), (0, 0)))
    taps = jnp.stack(
        [x_pad[:, dy:dy + H, dx:dx + W, :]
         for dy in range(kh) for dx in range(kw)],
        axis=0,
    )                                                         # (9, N, H, W, Cin)
    patches_T = (
        taps.transpose(0, 4, 1, 2, 3).reshape(K, M).astype(jnp.bfloat16)
    )                                                         # (K, M)

    out_T = pl.pallas_call(
        matmul_bias_relu_kernel,
        out_shape=jax.ShapeDtypeStruct((Cout, M), jnp.float32),
        in_specs=[pl.BlockSpec(memory_space=pltpu.MemorySpace.VMEM)] * 3,
        out_specs=pl.BlockSpec(memory_space=pltpu.MemorySpace.VMEM),
    )(w_T_bf16, patches_T, b_col)

    # Layout plumbing back to NHWC stays outside the kernel.
    return out_T.reshape(Cout, N, H, W).transpose(1, 2, 3, 0)


# ----------------------------------------------------------------------------
# Pallas kernel 2: gt /= gt.max() + 1e-8  (global max reduction + scale).
# One scalar reciprocal + a vector multiply instead of a per-element divide.
# ----------------------------------------------------------------------------
def maxnorm_kernel(g_ref, o_ref):
    g = g_ref[...]
    inv = 1.0 / (jnp.max(g) + 1e-8)
    o_ref[...] = g * inv


@jax.jit
def normalize_max(gt):
    gt = gt.astype(jnp.float32)
    orig_shape = gt.shape
    # Present a lane-dense slab to the kernel when possible (last dim = 128
    # -> unmasked vst); otherwise fall back to the original (>=2D) shape.
    if gt.size % 128 == 0:
        g2d = gt.reshape(gt.size // 128, 128)
    elif gt.ndim >= 2:
        g2d = gt
    else:
        g2d = gt.reshape(1, -1)
    out = pl.pallas_call(
        maxnorm_kernel,
        out_shape=jax.ShapeDtypeStruct(g2d.shape, jnp.float32),
        in_specs=[pl.BlockSpec(memory_space=pltpu.MemorySpace.VMEM)],
        out_specs=pl.BlockSpec(memory_space=pltpu.MemorySpace.VMEM),
    )(g2d)
    return out.reshape(orig_shape)


# ----------------------------------------------------------------------------
# Fused conv bank: conv1 and conv2 both consume the same (re)loaded image in
# the reference forward, so their weights/biases are concatenated along Cout
# and a single Pallas call produces both feature maps.  Each named member
# returns its slice of the cached fused result (cached by image identity).
# Weight layout transforms / casts happen once, at construction time.
# ----------------------------------------------------------------------------
class FusedConvBank:
    def __init__(self, convs):
        self.names = list(convs.keys())
        ws = [convs[n][0] for n in self.names]
        bs = [convs[n][1] for n in self.names]
        self.offsets = {}
        off = 0
        for n, w in zip(self.names, ws):
            self.offsets[n] = (off, off + w.shape[-1])
            off += w.shape[-1]
        w_all = jnp.concatenate(ws, axis=-1)    # (3, 3, Cin, sum(Cout))
        b_all = jnp.concatenate(bs, axis=0)     # (sum(Cout),)
        kh, kw, cin, cout = w_all.shape
        self.kh, self.kw = kh, kw
        self.w_T = w_all.reshape(kh * kw * cin, cout).T.astype(jnp.bfloat16)
        self.b_col = b_all.reshape(cout, 1).astype(jnp.float32)
        self._cached_image = None
        self._cached_out = None

    def _fused(self, image_nhwc):
        if self._cached_out is None or self._cached_image is not image_nhwc:
            self._cached_image = image_nhwc
            self._cached_out = _conv3x3_relu_fused_impl(
                image_nhwc, self.w_T, self.b_col, kh=self.kh, kw=self.kw
            )
        return self._cached_out

    def module(self, name):
        lo, hi = self.offsets[name]
        return lambda image: self._fused(image)[..., lo:hi]


# ----------------------------------------------------------------------------
# FeatureExtractor: mirrors the PyTorch forward's extraction logic.
# Each module is applied to the image (the reference reloads the image per
# iteration), and the filter condition is kept verbatim from the reference.
# ----------------------------------------------------------------------------
class FeatureExtractor:
    def __init__(self, submodule, extracted_layers):
        self.submodule = submodule
        self.extracted_layers = extracted_layers

    def forward(self, image_nchw, gt):
        outputs = {}
        # gt = np.asarray(gt, np.float32); gt /= gt.max() + 1e-08
        gt = normalize_max(gt)
        # NCHW (PyTorch) -> NHWC (kernel layout)
        image = jnp.transpose(image_nchw, (0, 2, 3, 1)).astype(jnp.float32)
        for name, module in self.submodule.items():
            x = module(image)
            # Identical condition to the PyTorch reference.
            if self.extracted_layers is None or (
                name in self.extracted_layers and "fc" not in name
            ):
                outputs[name] = x
        return outputs, gt


# ----------------------------------------------------------------------------
# Deterministic synthetic parameters + demo run + numeric self-check.
# ----------------------------------------------------------------------------
if __name__ == "__main__":
    key = jax.random.PRNGKey(0)
    k_x, k_gt, k_w1, k_b1, k_w2, k_b2, k_wf, k_bf = jax.random.split(key, 8)

    N, Cin, H, W = 2, 4, 16, 16       # PyTorch-style NCHW input
    Cout = 32
    fc_dim = 8

    x_nchw = jax.random.normal(k_x, (N, Cin, H, W), jnp.float32)
    gt = jax.random.uniform(k_gt, (H, W), jnp.float32)

    w1 = 0.1 * jax.random.normal(k_w1, (3, 3, Cin, Cout), jnp.float32)  # HWIO
    b1 = 0.01 * jax.random.normal(k_b1, (Cout,), jnp.float32)
    w2 = 0.1 * jax.random.normal(k_w2, (3, 3, Cin, Cout), jnp.float32)
    b2 = 0.01 * jax.random.normal(k_b2, (Cout,), jnp.float32)
    wf = 0.1 * jax.random.normal(k_wf, (H * W * Cin, fc_dim), jnp.float32)
    bf = 0.01 * jax.random.normal(k_bf, (fc_dim,), jnp.float32)

    bank = FusedConvBank({"conv1": (w1, b1), "conv2": (w2, b2)})
    submodule = {
        "conv1": bank.module("conv1"),
        "conv2": bank.module("conv2"),
        # 'fc' runs but is excluded from the extracted outputs ('fc' filter);
        # plain JAX glue since it never reaches the output dict.
        "fc": lambda img: jnp.dot(img.reshape(img.shape[0], -1), wf) + bf,
    }
    extractor = FeatureExtractor(
        submodule, extracted_layers=["conv1", "conv2", "fc"]
    )

    outputs, gt_norm = extractor.forward(x_nchw, gt)
    jax.block_until_ready(outputs)
    jax.block_until_ready(gt_norm)

    # --- structural checks ---------------------------------------------------
    assert set(outputs.keys()) == {"conv1", "conv2"}   # 'fc' filtered out
    assert outputs["conv1"].shape == (N, H, W, Cout)   # NHWC feature maps
    assert outputs["conv2"].shape == (N, H, W, Cout)
    assert gt_norm.shape == (H, W)

    # --- numeric checks vs. plain XLA reference (bf16-operand tolerance) -----
    x_nhwc = jnp.transpose(x_nchw, (0, 2, 3, 1))
    dn = ("NHWC", "HWIO", "NHWC")
    ref1 = jax.nn.relu(
        lax.conv_general_dilated(x_nhwc, w1, (1, 1), "SAME",
                                 dimension_numbers=dn) + b1)
    ref2 = jax.nn.relu(
        lax.conv_general_dilated(x_nhwc, w2, (1, 1), "SAME",
                                 dimension_numbers=dn) + b2)
    assert jnp.allclose(outputs["conv1"], ref1, atol=5e-2, rtol=5e-2)
    assert jnp.allclose(outputs["conv2"], ref2, atol=5e-2, rtol=5e-2)
    assert jnp.allclose(gt_norm, gt / (jnp.max(gt) + 1e-8), atol=1e-5)

    print("KERNEL_OK")
</pallas_src>

<mosaic_0001>
module attributes {stable_mosaic.version = 11 : i64} {
  func.func @maxnorm_kernel(%arg0: memref<2x128xf32, #tpu.memory_space<vmem>>, %arg1: memref<2x128xf32, #tpu.memory_space<vmem>>) attributes {dimension_semantics = [], scalar_prefetch = 0 : i64, scratch_operands = 0 : i64, tpu.core_type = #tpu.core_type<tc>} {
    %c0 = arith.constant 0 : index
    %c0_0 = arith.constant 0 : index
    %0 = vector.load %arg0[%c0, %c0_0] : memref<2x128xf32, #tpu.memory_space<vmem>>, vector<2x128xf32>
    %1 = vector.shape_cast %0 : vector<2x128xf32> to vector<1x2x128xf32>
    %cst = arith.constant dense<0xFF800000> : vector<1xf32>
    %2 = vector.multi_reduction <maximumf>, %1, %cst [1, 2] : vector<1x2x128xf32> to vector<1xf32>
    %3 = vector.shape_cast %2 : vector<1xf32> to vector<1x1x1xf32>
    %4 = vector.extract %3[0, 0, 0] : f32 from vector<1x1x1xf32>
    %cst_1 = arith.constant 9.99999993E-9 : f32
    %5 = arith.addf %4, %cst_1 : f32
    %cst_2 = arith.constant 1.000000e+00 : f32
    %6 = arith.divf %cst_2, %5 : f32
    %7 = vector.broadcast %6 : f32 to vector<2x128xf32>
    %8 = arith.mulf %0, %7 : vector<2x128xf32>
    %c0_3 = arith.constant 0 : index
    %c0_4 = arith.constant 0 : index
    %9 = vector.load %arg1[%c0_3, %c0_4] : memref<2x128xf32, #tpu.memory_space<vmem>>, vector<2x128xf32>
    tpu.vector_store %arg1[%c0_3, %c0_4], %8 {strides = array<i32>} : memref<2x128xf32, #tpu.memory_space<vmem>>, vector<2x128xf32>,
    return
  }
}

</mosaic_0001>

<llo_original>
// kernel: normalize_max.1
$region0: #{normalize_max.1}
  #allocation0 [shape = 'u32[]', space=smem, size = 0x4, offset = 0x4, fixed_abs, tag = 'smem constant byte address 0x4 - core index']
  #allocation1 [shape = 'u32[72,128]{1,0:T(1,128)}', space=vmem, size = 0x9000, scoped, tag = 'internal scratch']
  %s0 = inlined_call_operand.vmem [shape: f32[2,128], index: 0, kind: input, shape index: {}]
  %s1 = inlined_call_operand.vmem [shape: f32[2,128], index: 1, kind: output, shape index: {}]
  %s2 = sld [smem:[#allocation0]]
  $region14: #{normalize_max.1} parent=0
    _
  %s4 = ssub.s32 1, %s2
  %s5 = scalar_select 0, %s4, %s2
  // Predicated region
  $region2: #{normalize_max.1} parent=0 // pred_check
    _
  $region3: #{normalize_max.1} parent=0 // pred_check_branch
    %7 = sbr.rel (0) target = $region5
  $region4: #{normalize_max.1} parent=0 // pred_region
    _
  $region5: #{normalize_max.1} parent=0 // pred_fallthru
    _
  %v8 = vld [vmem:[%s0] sm:$0x3]
  %vm9 = vcmask 1041408
  %v10 = vsel %vm9, %v8, -inf
  %11 = vmax.xlane.f32.xlu0 %v10
  %v12 = vpop.xlane.xlu0 %11
  %v13 = vrot.slane %v12, 4
  %v14 = vmax.f32 %v12, %v13
  %v15 = vrot.slane %v14, 2
  %v16 = vmax.f32 %v14, %v15
  %v17 = vrot.slane %v16, 1
  %v18 = vmax.f32 %v16, %v17
  %s19 = vtos %v18
  %s20 = sadd.f32 %s19, 1e-08
  %v21 = vstv %s20
  %v22 = vrcp.pop %v21
  %v23 = vmul.f32 %v21, %v22
  %v24 = vsub.f32 1.0, %v23
  %v25 = vmul.f32 %v22, %v24
  %v26 = vadd.f32 %v22, %v25
  %vm27 = vweird.f32 %v21
  %vm28 = vweird.f32 %v22
  %vm29 = vmor %vm27, %vm28
  %v30 = vsel %vm29, %v22, %v26
  %v31 = vand.u32 2147483647, %v21
  %vm32 = vcmp.eq.f32.partialorder %v31, 8.507059e+37
  %v33 = vand.u32 %v21, 2147483648
  %v34 = vor.u32 1.1754944e-38, %v33
  %v35 = vsel %vm32, %v34, %v30
  %s36 = vtos %v35
  %v37 = vstv %s36
  %v38 = vmul.f32 %v8, %v37
  %39 = vst [vmem:[%s1] sm:$0x3] %v38
  // Predicated region
  $region6: #{normalize_max.1} parent=0 // pred_check
    _
  $region7: #{normalize_max.1} parent=0 // pred_check_branch
    %41 = sbr.rel (0) target = $region9
  $region8: #{normalize_max.1} parent=0 // pred_region
    _
  $region9: #{normalize_max.1} parent=0 // pred_fallthru
    _
  // Predicated region
  $region10: #{normalize_max.1} parent=0 // pred_check
    _
  $region11: #{normalize_max.1} parent=0 // pred_check_branch
    %43 = sbr.rel (0) target = $region13
  $region12: #{normalize_max.1} parent=0 // pred_region
    _
  $region13: #{normalize_max.1} parent=0 // pred_fallthru
    _

</llo_original>
